<compile_context>
chip_gen: v6e
topology: v6e:2x2x1
jax: 0.10.0
libtpu: 0.0.40
codegen_flags: <defaults>
</compile_context>

<pallas_src>
import functools

import jax
import jax.numpy as jnp
from jax.experimental import pallas as pl
from jax.experimental.pallas import tpu as pltpu

_L_TILE = 128        # lane-dense output tile (multiple of 128)
_CO_TILE_MAX = 1024  # C_out tile used only when C_out is huge (fff: 16384)


# ----------------------------------------------------------------------------
# Pointwise (kernel_size=1) conv kernels
# ----------------------------------------------------------------------------
def _pw_kernel(x_ref, w_ref, b_ref, o_ref, *, relu):
    # x: (C_in, L_TILE), w: (co_tile, C_in), b: (co_tile, 1), o: (co_tile, L_TILE)
    acc = jnp.dot(w_ref[...], x_ref[...], preferred_element_type=jnp.float32)
    acc = acc + b_ref[...]
    if relu:
        acc = jnp.maximum(acc, 0.0)
    o_ref[...] = acc.astype(o_ref.dtype)


def _pw_res_kernel(x_ref, w_ref, b_ref, r_ref, o_ref):
    # Same as above + residual add (the cma layer).
    acc = jnp.dot(w_ref[...], x_ref[...], preferred_element_type=jnp.float32)
    o_ref[...] = (acc + b_ref[...] + r_ref[...]).astype(o_ref.dtype)


def conv1d_1x1(x, w, b, *, relu=False, res=None):
    """Pointwise Conv1d in native NCW layout.

    x: (N, C_in, L) f32; w: (C_out, C_in); b: (C_out,); res: optional (N, C_out, L).
    Returns (N, C_out, L) f32.
    """
    N, C_in, L = x.shape
    C_out = w.shape[0]

    # Pad positions to a multiple of the lane tile so output stores are unmasked.
    L_pad = ((L + _L_TILE - 1) // _L_TILE) * _L_TILE
    if L_pad != L:
        x = jnp.pad(x, ((0, 0), (0, 0), (0, L_pad - L)))
        if res is not None:
            res = jnp.pad(res, ((0, 0), (0, 0), (0, L_pad - L)))

    # Tile C_out only when it is huge (fff: 16384 -> 1024-row weight slabs).
    if C_out > _CO_TILE_MAX and C_out % _CO_TILE_MAX == 0:
        co_tile = _CO_TILE_MAX
    else:
        co_tile = C_out
    n_co = C_out // co_tile
    n_l = L_pad // _L_TILE

    b_col = b.reshape(C_out, 1)

    in_specs = [
        # x: one (C_in, L_TILE) slab per (batch, position-tile) grid point.
        pl.BlockSpec((None, C_in, _L_TILE), lambda n, c, l: (n, 0, l)),
        # W / bias: constant along the L axis -> stay resident in VMEM.
        pl.BlockSpec((co_tile, C_in), lambda n, c, l: (c, 0)),
        pl.BlockSpec((co_tile, 1), lambda n, c, l: (c, 0)),
    ]
    args = [x, w, b_col]
    if res is None:
        kernel = functools.partial(_pw_kernel, relu=relu)
    else:
        kernel = _pw_res_kernel
        in_specs.append(
            pl.BlockSpec((None, co_tile, _L_TILE), lambda n, c, l: (n, c, l)))
        args.append(res)

    flops = 2 * N * L_pad * C_in * C_out
    bytes_accessed = 4 * (N * C_in * L_pad + C_in * C_out + C_out
                          + N * C_out * L_pad
                          + (N * C_out * L_pad if res is not None else 0))

    out = pl.pallas_call(
        kernel,
        out_shape=jax.ShapeDtypeStruct((N, C_out, L_pad), jnp.float32),
        grid=(N, n_co, n_l),
        in_specs=in_specs,
        out_specs=pl.BlockSpec((None, co_tile, _L_TILE), lambda n, c, l: (n, c, l)),
        compiler_params=pltpu.CompilerParams(
            dimension_semantics=("parallel", "parallel", "parallel")),
        cost_estimate=pl.CostEstimate(
            flops=flops, transcendentals=0, bytes_accessed=bytes_accessed),
    )(*args)

    if L_pad != L:
        out = out[:, :, :L]
    return out


# ----------------------------------------------------------------------------
# kernel_size=3, padding=0, ReLU conv kernel (cl1 / claa / clfa / ccac)
# ----------------------------------------------------------------------------
def _conv3_relu_kernel(x_ref, w_ref, b_ref, o_ref):
    # x: (C_in, L), w: (3, C_out, C_in), b: (C_out, 1), o: (C_out, L-2)
    L_out = o_ref.shape[-1]
    xv = x_ref[...]
    wv = w_ref[...]
    acc = jnp.dot(wv[0], xv[:, 0:L_out], preferred_element_type=jnp.float32)
    acc = acc + jnp.dot(wv[1], xv[:, 1:L_out + 1], preferred_element_type=jnp.float32)
    acc = acc + jnp.dot(wv[2], xv[:, 2:L_out + 2], preferred_element_type=jnp.float32)
    o_ref[...] = jnp.maximum(acc + b_ref[...], 0.0).astype(o_ref.dtype)


def conv1d_k3_relu(x, w, b):
    """Valid (pad=0) 3-tap Conv1d + ReLU.  x: (N, C_in, L); w: (C_out, C_in, 3)."""
    N, C_in, L = x.shape
    C_out = w.shape[0]
    L_out = L - 2
    w3 = jnp.transpose(w, (2, 0, 1))  # (3, C_out, C_in): cheap leading-dim tap index
    b_col = b.reshape(C_out, 1)

    return pl.pallas_call(
        _conv3_relu_kernel,
        out_shape=jax.ShapeDtypeStruct((N, C_out, L_out), jnp.float32),
        grid=(N,),
        in_specs=[
            pl.BlockSpec((None, C_in, L), lambda n: (n, 0, 0)),
            pl.BlockSpec((3, C_out, C_in), lambda n: (0, 0, 0)),
            pl.BlockSpec((C_out, 1), lambda n: (0, 0)),
        ],
        out_specs=pl.BlockSpec((None, C_out, L_out), lambda n: (n, 0, 0)),
        compiler_params=pltpu.CompilerParams(dimension_semantics=("parallel",)),
    )(x, w3, b_col)


# ----------------------------------------------------------------------------
# Pure-JAX reference implementations of the same two ops (for validation)
# ----------------------------------------------------------------------------
def _conv1x1_ref(x, w, b, *, relu=False, res=None):
    y = jnp.einsum("oc,ncl->nol", w, x,
                   precision=jax.lax.Precision.HIGHEST) + b[None, :, None]
    if res is not None:
        y = y + res
    if relu:
        y = jnp.maximum(y, 0.0)
    return y


def _conv3_relu_ref(x, w, b):
    L_out = x.shape[-1] - 2
    y = b[None, :, None]
    for k in range(3):
        y = y + jnp.einsum("oc,ncl->nol", w[:, :, k], x[:, :, k:k + L_out],
                           precision=jax.lax.Precision.HIGHEST)
    return jnp.maximum(y, 0.0)


# ----------------------------------------------------------------------------
# decoder.forward — same graph as the PyTorch module, parameterized by the
# conv implementations (Pallas kernels or pure-JAX reference).
# ----------------------------------------------------------------------------
def decoder_forward(params, x_tokens, ees, tpi, *, conv1x1, conv3):
    ssb, sst = x_tokens.shape
    sl = ees.shape[2]

    # TODO(synk): layers.lpre is not defined in the spec; placeholder = embedding
    # lookup with the weight tied to fff (fff.weight = pre.ee1.weight in PyTorch).
    pre_d = jnp.take(params["fff_w"], x_tokens, axis=0)          # (ssb, sst, 64)
    pre_d = jnp.transpose(pre_d, (0, 2, 1)).astype(jnp.float32)  # (ssb, 64, sst)

    t = conv1x1(pre_d, params["cl0_w"], params["cl0_b"])         # (ssb, 112, sst)
    tp = jnp.full((ssb, 112, 2), tpi, dtype=jnp.float32)
    # x2[n, c, i*sst + j] = ees[n, c, i]
    x2 = jnp.repeat(ees[:, :, :, None], sst, axis=3).reshape(ssb, 64, sl * sst)

    def refine(t_in, w3, b3):
        tcat = jnp.concatenate([tp, t_in], axis=2)               # (ssb, 112, sst+2)
        xconv = conv3(tcat, w3, b3)                              # (ssb, 112, sst)
        u = conv1x1(xconv, params["cib_w"], params["cib_b"])     # (ssb, 64, sst)
        u = jnp.repeat(u[:, :, None, :], sl, axis=2).reshape(ssb, 64, sl * sst)
        u = jnp.concatenate([u, x2], axis=1)                     # (ssb, 128, sl*sst)
        u = conv1x1(u, params["cpr1_w"], params["cpr1_b"], relu=True)
        u = conv1x1(u, params["cpr2_w"], params["cpr2_b"], relu=True)
        u = u.reshape(ssb, 64, sl, sst).max(axis=2)              # (ssb, 64, sst)
        # cma: pointwise conv + residual add with xconv
        return conv1x1(u, params["cma_w"], params["cma_b"], res=xconv)

    t = refine(t, params["cl1_w"], params["cl1_b"])
    t = refine(t, params["claa_w"], params["claa_b"])
    t = refine(t, params["clfa_w"], params["clfa_b"])
    t = refine(t, params["ccac_w"], params["ccac_b"])

    ccf_out = conv1x1(t, params["ccf_w"], params["ccf_b"])       # (ssb, 64, sst)
    # fff Linear(64 -> 16384) applied per position == pointwise conv in NCW.
    z = conv1x1(ccf_out, params["fff_w"], params["fff_b"])       # (ssb, 16384, sst)
    output = jnp.transpose(z, (0, 2, 1))                         # (ssb, sst, 16384)
    return output, pre_d, ccf_out


# ----------------------------------------------------------------------------
if __name__ == "__main__":
    key = jax.random.PRNGKey(0)
    keys = jax.random.split(key, 26)

    ssb, sst, sl = 2, 6, 3
    vocab, d_emb = 16384, 64
    tpi = 0.5

    def u(k, shape, fan_in):
        bound = 1.0 / jnp.sqrt(jnp.float32(fan_in))
        return jax.random.uniform(k, shape, jnp.float32, -bound, bound)

    params = {
        # fff Linear(64 -> 16384); weight shared with the lpre embedding.
        "fff_w": u(keys[0], (vocab, d_emb), d_emb),
        "fff_b": u(keys[1], (vocab,), d_emb),
        # cl0: Conv1d(64 -> 112, k=1)
        "cl0_w": u(keys[2], (112, 64), 64), "cl0_b": u(keys[3], (112,), 64),
        # cib: Conv1d(112 -> 64, k=1)
        "cib_w": u(keys[4], (64, 112), 112), "cib_b": u(keys[5], (64,), 112),
        # cma: Conv1d(64 -> 112, k=1) (+ residual add)
        "cma_w": u(keys[6], (112, 64), 64), "cma_b": u(keys[7], (112,), 64),
        # cpr: Conv1d(128 -> 64, k=1, relu) ; Conv1d(64 -> 64, k=1, relu)
        "cpr1_w": u(keys[8], (64, 128), 128), "cpr1_b": u(keys[9], (64,), 128),
        "cpr2_w": u(keys[10], (64, 64), 64), "cpr2_b": u(keys[11], (64,), 64),
        # ccf: Conv1d(112 -> 64, k=1)
        "ccf_w": u(keys[12], (64, 112), 112), "ccf_b": u(keys[13], (64,), 112),
        # 3-tap relu convs: Conv1d(112 -> 112, k=3, pad=0)
        "cl1_w": u(keys[14], (112, 112, 3), 336), "cl1_b": u(keys[15], (112,), 336),
        "claa_w": u(keys[16], (112, 112, 3), 336), "claa_b": u(keys[17], (112,), 336),
        "clfa_w": u(keys[18], (112, 112, 3), 336), "clfa_b": u(keys[19], (112,), 336),
        "ccac_w": u(keys[20], (112, 112, 3), 336), "ccac_b": u(keys[21], (112,), 336),
    }

    x_tokens = jax.random.randint(keys[22], (ssb, sst), 0, vocab, dtype=jnp.int32)
    ees = jax.random.normal(keys[23], (ssb, 64, sl), dtype=jnp.float32)

    # Pallas-kernel forward.
    out_pallas = decoder_forward(params, x_tokens, ees, tpi,
                                 conv1x1=conv1d_1x1, conv3=conv1d_k3_relu)
    jax.block_until_ready(out_pallas)

    # Pure-JAX reference of the exact same graph.
    out_ref = decoder_forward(params, x_tokens, ees, tpi,
                              conv1x1=_conv1x1_ref, conv3=_conv3_relu_ref)
    jax.block_until_ready(out_ref)

    assert out_pallas[0].shape == (ssb, sst, vocab)
    assert out_pallas[1].shape == (ssb, 64, sst)
    assert out_pallas[2].shape == (ssb, 64, sst)
    for a, b in zip(out_pallas, out_ref):
        assert a.shape == b.shape
        err = float(jnp.max(jnp.abs(a - b)))
        assert jnp.allclose(a, b, atol=1e-2, rtol=1e-2), err

    print("KERNEL_OK")
</pallas_src>

<mosaic_0001>
module attributes {stable_mosaic.version = 11 : i64} {
  func.func @_pw_kernel(%arg0: i32, %arg1: i32, %arg2: i32, %arg3: memref<1x64x128xf32, #tpu.memory_space<vmem>>, %arg4: memref<112x64xf32, #tpu.memory_space<vmem>>, %arg5: memref<112x1xf32, #tpu.memory_space<vmem>>, %arg6: memref<1x112x128xf32, #tpu.memory_space<vmem>>) attributes {dimension_semantics = [#tpu.dimension_semantics<parallel>, #tpu.dimension_semantics<parallel>, #tpu.dimension_semantics<parallel>], iteration_bounds = array<i64: 2, 1, 1>, scalar_prefetch = 0 : i64, scratch_operands = 0 : i64, tpu.core_type = #tpu.core_type<tc>, window_params = [{transform_indices = @transform_0, window_bounds = array<i64: 1, 64, 128>}, {transform_indices = @transform_1, window_bounds = array<i64: 112, 64>}, {transform_indices = @transform_2, window_bounds = array<i64: 112, 1>}, {transform_indices = @transform_3, window_bounds = array<i64: 1, 112, 128>}]} {
    %c0 = arith.constant 0 : index
    %c0_0 = arith.constant 0 : index
    %0 = vector.load %arg4[%c0, %c0_0] : memref<112x64xf32, #tpu.memory_space<vmem>>, vector<112x64xf32>
    %c0_1 = arith.constant 0 : index
    %c0_2 = arith.constant 0 : index
    %c0_3 = arith.constant 0 : index
    %1 = vector.load %arg3[%c0_1, %c0_2, %c0_3] : memref<1x64x128xf32, #tpu.memory_space<vmem>>, vector<1x64x128xf32>
    %2 = vector.shape_cast %1 : vector<1x64x128xf32> to vector<64x128xf32>
    %cst = arith.constant dense<0.000000e+00> : vector<112x128xf32>
    %3 = tpu.matmul %0, %2, %cst {dimension_numbers = #tpu.dot_dimension_numbers<[1], [0], [0], [1], [0, 0, 1, 1], [], []>} : vector<112x64xf32>, vector<64x128xf32>, vector<112x128xf32> -> vector<112x128xf32>
    %c0_4 = arith.constant 0 : index
    %c0_5 = arith.constant 0 : index
    %4 = vector.load %arg5[%c0_4, %c0_5] : memref<112x1xf32, #tpu.memory_space<vmem>>, vector<112x1xf32>
    %5 = vector.broadcast %4 : vector<112x1xf32> to vector<112x128xf32>
    %6 = arith.addf %3, %5 : vector<112x128xf32>
    %c0_6 = arith.constant 0 : index
    %c0_7 = arith.constant 0 : index
    %c0_8 = arith.constant 0 : index
    %7 = vector.load %arg6[%c0_6, %c0_7, %c0_8] : memref<1x112x128xf32, #tpu.memory_space<vmem>>, vector<1x112x128xf32>
    %8 = vector.shape_cast %7 : vector<1x112x128xf32> to vector<112x128xf32>
    %9 = vector.shape_cast %6 : vector<112x128xf32> to vector<1x112x128xf32>
    tpu.vector_store %arg6[%c0_6, %c0_7, %c0_8], %9 {strides = array<i32>} : memref<1x112x128xf32, #tpu.memory_space<vmem>>, vector<1x112x128xf32>,
    return
  }
  func.func @transform_0(%arg0: i32, %arg1: i32, %arg2: i32) -> (i32, i32, i32) {
    %c0_i32 = arith.constant 0 : i32
    %c0_i32_0 = arith.constant 0 : i32
    return %arg0, %c0_i32, %arg2 : i32, i32, i32
  }
  func.func @transform_1(%arg0: i32, %arg1: i32, %arg2: i32) -> (i32, i32) {
    %c0_i32 = arith.constant 0 : i32
    %c0_i32_0 = arith.constant 0 : i32
    return %arg1, %c0_i32 : i32, i32
  }
  func.func @transform_2(%arg0: i32, %arg1: i32, %arg2: i32) -> (i32, i32) {
    %c0_i32 = arith.constant 0 : i32
    %c0_i32_0 = arith.constant 0 : i32
    return %arg1, %c0_i32 : i32, i32
  }
  func.func @transform_3(%arg0: i32, %arg1: i32, %arg2: i32) -> (i32, i32, i32) {
    %c0_i32 = arith.constant 0 : i32
    return %arg0, %arg1, %arg2 : i32, i32, i32
  }
}

</mosaic_0001>

<llo_original>
// kernel: tpu_custom_call.1
$region0: #{tpu_custom_call.1}
  #allocation0 [shape = 'u32[]', space=smem, size = 0x4, offset = 0x4, fixed_abs, tag = 'smem constant byte address 0x4 - core index']
  #allocation1 [shape = 'u32[144,128]{1,0:T(1,128)}', space=vmem, size = 0x12000, scoped, tag = 'internal scratch']
  %s0 = inlined_call_operand.vmem [shape: f32[2,64,128], index: 0, kind: input, shape index: {}]
  %s1 = inlined_call_operand.vmem [shape: f32[112,64], index: 1, kind: input, shape index: {}]
  %s2 = inlined_call_operand.vmem [shape: f32[112,1], index: 2, kind: input, shape index: {}]
  %s3 = inlined_call_operand.hbm [shape: f32[2,112,128], index: 3, kind: output, shape index: {}]
  %s4 = sld [smem:[#allocation0]]
  $region45: #{tpu_custom_call.1} parent=0
    _
  %s6 = ssub.s32 1, %s4
  %s7 = scalar_select 0, %s6, %s4
  $region1: #{tpu_custom_call.1} parent=0
    #allocation2 [shape = 'u8[114688]{0}', space=vmem, size = 0x1c000, scoped, tag = 'output window, operand 0']
    #allocation3 [shape = 's32[2]{0}', space=sflag, size = 0x8, scoped, tag = 'scoped memory for tpu_custom_call.1']
    %8 = vsyncpa [#allocation3], 0
    %s9 = scalar_lea.sflag [#allocation3], 1
    %10 = vsyncpa %s9, 0
    loop: start=0, step=1, limit=4
    $region2: #{tpu_custom_call.1} parent=1 // loop_pre_header
      _
    $region3: #{tpu_custom_call.1} parent=1 // loop_header
      %s12 = sphi 0, %s16
      %p13 = scmp.ge.s32.totalorder %s12, 4
      %s19 = sphi 0, %s38
      %s20 = sphi 0, %s34
      %s21 = sphi 0, %s30
      %s22 = sphi 0, %s19
      %s23 = sphi 0, %s20
      %s24 = sphi 0, %s21
      %s25 = sphi 0, %s22
      %s26 = sphi 0, %s23
      %s27 = sphi 0, %s24
      %s43 = sphi 0, %s45
      %s46 = sphi 0, %s43
      %s47 = sphi 0, %s46
      %s63 = sphi 0, %s47
      %s69 = sphi 0, %s71
      %s72 = sphi 0, %s69
      %s73 = sphi 0, %s72
      %s89 = sphi 0, %s73
      %s95 = sphi 0, %s97
      %s98 = sphi 0, %s95
      %s99 = sphi 0, %s98
      %s115 = sphi 0, %s99
      %s125 = sphi 0, %s127
      %s128 = sphi 0, %s125
      %s129 = sphi 0, %s128
      %s145 = sphi 0, %s129
    $region4: #{tpu_custom_call.1} parent=1 // loop_header_branch
      %15 = sbr.rel (%p13) target = $region8
    $region5: #{tpu_custom_call.1} parent=1 // loop_body
      %s17 = ssub.s32 %s12, 1
      %s18 = ssub.s32 %s12, 2
      %s28 = sadd.s32 1, %s21
      %p29 = scmp.ge.s32.totalorder %s28, 1
      %s30 = scalar_select %p29, 0, %s28
      %s31 = sadd.s32 1, %s20
      %s32 = scalar_select %p29, %s31, %s20
      %p33 = scmp.ge.s32.totalorder %s32, 1
      %s34 = scalar_select %p33, 0, %s32
      %s35 = sadd.s32 1, %s19
      %s36 = scalar_select %p33, %s35, %s19
      %p37 = scmp.ge.s32.totalorder %s36, 2
      %s38 = scalar_select %p37, 0, %s36
      %s39 = ssub.s32 %s19, %s38
      %s40 = ssub.s32 %s21, %s30
      %s41 = sor.u32 %s39, %s40
      %p42 = scmp.eq.s32.totalorder %s41, 0
      %s44 = sadd.s32 %s43, 1
      %s45 = scalar_select %p42, %s43, %s44
      %p48 = pneg %p42
      %p49 = scmp.eq.s32.totalorder %s12, 1
      %p50 = por %p48, %p49
      %p51 = scmp.ne.s32.totalorder %s43, %s46
      %p52 = scmp.eq.s32.totalorder %s12, 0
      %p53 = por %p51, %p52
      %p54 = scmp.ne.s32.totalorder %s43, %s46
      %p55 = scmp.eq.s32.totalorder %s17, 1
      %p56 = por %p54, %p55
      %p57 = scmp.ne.s32.totalorder %s46, %s47
      %p58 = scmp.eq.s32.totalorder %s17, 0
      %p59 = por %p57, %p58
      %p60 = scmp.ne.s32.totalorder %s46, %s47
      %p61 = scmp.eq.s32.totalorder %s18, 1
      %p62 = por %p60, %p61
      %p64 = scmp.ne.s32.totalorder %s47, %s63
      %p65 = scmp.eq.s32.totalorder %s18, 0
      %p66 = por %p64, %p65
      %s67 = ssub.s32 %s20, %s34
      %p68 = scmp.eq.s32.totalorder %s67, 0
      %s70 = sadd.s32 %s69, 1
      %s71 = scalar_select %p68, %s69, %s70
      %p74 = pneg %p68
      %p75 = scmp.eq.s32.totalorder %s12, 1
      %p76 = por %p74, %p75
      %p77 = scmp.ne.s32.totalorder %s69, %s72
      %p78 = scmp.eq.s32.totalorder %s12, 0
      %p79 = por %p77, %p78
      %p80 = scmp.ne.s32.totalorder %s69, %s72
      %p81 = scmp.eq.s32.totalorder %s17, 1
      %p82 = por %p80, %p81
      %p83 = scmp.ne.s32.totalorder %s72, %s73
      %p84 = scmp.eq.s32.totalorder %s17, 0
      %p85 = por %p83, %p84
      %p86 = scmp.ne.s32.totalorder %s72, %s73
      %p87 = scmp.eq.s32.totalorder %s18, 1
      %p88 = por %p86, %p87
      %p90 = scmp.ne.s32.totalorder %s73, %s89
      %p91 = scmp.eq.s32.totalorder %s18, 0
      %p92 = por %p90, %p91
      %s93 = ssub.s32 %s20, %s34
      %p94 = scmp.eq.s32.totalorder %s93, 0
      %s96 = sadd.s32 %s95, 1
      %s97 = scalar_select %p94, %s95, %s96
      %p100 = pneg %p94
      %p101 = scmp.eq.s32.totalorder %s12, 1
      %p102 = por %p100, %p101
      %p103 = scmp.ne.s32.totalorder %s95, %s98
      %p104 = scmp.eq.s32.totalorder %s12, 0
      %p105 = por %p103, %p104
      %p106 = scmp.ne.s32.totalorder %s95, %s98
      %p107 = scmp.eq.s32.totalorder %s17, 1
      %p108 = por %p106, %p107
      %p109 = scmp.ne.s32.totalorder %s98, %s99
      %p110 = scmp.eq.s32.totalorder %s17, 0
      %p111 = por %p109, %p110
      %p112 = scmp.ne.s32.totalorder %s98, %s99
      %p113 = scmp.eq.s32.totalorder %s18, 1
      %p114 = por %p112, %p113
      %p116 = scmp.ne.s32.totalorder %s99, %s115
      %p117 = scmp.eq.s32.totalorder %s18, 0
      %p118 = por %p116, %p117
      %s119 = ssub.s32 %s19, %s38
      %s120 = ssub.s32 %s20, %s34
      %s121 = sor.u32 %s119, %s120
      %s122 = ssub.s32 %s21, %s30
      %s123 = sor.u32 %s121, %s122
      %p124 = scmp.eq.s32.totalorder %s123, 0
      %s126 = sadd.s32 %s125, 1
      %s127 = scalar_select %p124, %s125, %s126
      %p130 = pneg %p124
      %p131 = scmp.eq.s32.totalorder %s12, 1
      %p132 = por %p130, %p131
      %p133 = scmp.ne.s32.totalorder %s125, %s128
      %p134 = scmp.eq.s32.totalorder %s12, 0
      %p135 = por %p133, %p134
      %p136 = scmp.ne.s32.totalorder %s125, %s128
      %p137 = scmp.eq.s32.totalorder %s17, 1
      %p138 = por %p136, %p137
      %p139 = scmp.ne.s32.totalorder %s128, %s129
      %p140 = scmp.eq.s32.totalorder %s17, 0
      %p141 = por %p139, %p140
      %p142 = scmp.ne.s32.totalorder %s128, %s129
      %p143 = scmp.eq.s32.totalorder %s18, 1
      %p144 = por %p142, %p143
      %p146 = scmp.ne.s32.totalorder %s129, %s145
      %p147 = scmp.eq.s32.totalorder %s18, 0
      %p148 = por %p146, %p147
      %p149 = scmp.le.s32.totalorder 1, %s12
      %p150 = scmp.lt.s32.totalorder %s12, 3
      %p151 = pnand %p149, %p150
      %p152 = pneg %p151
      // Predicated region
      $region9: #{tpu_custom_call.1} parent=5 // pred_check
        _
      $region10: #{tpu_custom_call.1} parent=5 // pred_check_branch
        %154 = sbr.rel (%p151) target = $region12
      $region11: #{tpu_custom_call.1} parent=5 // pred_region
        %s155 = ssub.s32 %s12, 1
        // Predicated region
        $region13: #{tpu_custom_call.1} parent=11 // pred_check
          %p156 = pneg %p85
        $region14: #{tpu_custom_call.1} parent=11 // pred_check_branch
          %158 = sbr.rel (%p156) target = $region16
        $region15: #{tpu_custom_call.1} parent=11 // pred_region
          %s159 = smul.u32 14, %s23
          %p160 = scmp.lt.s32.totalorder %s159, 13
          %s161 = scalar_select %p160, %s159, 13
          %s162 = smul.addr %s161, 8
          %s163 = scalar_lea.vmem %s1, %s162
          %s164 = smul.u32 14, %s23
        $region16: #{tpu_custom_call.1} parent=11 // pred_fallthru
          _
        // Predicated region
        $region17: #{tpu_custom_call.1} parent=11 // pred_check
          %p165 = pneg %p111
        $region18: #{tpu_custom_call.1} parent=11 // pred_check_branch
          %167 = sbr.rel (%p165) target = $region20
        $region19: #{tpu_custom_call.1} parent=11 // pred_region
          %s168 = smul.u32 14, %s23
          %p169 = scmp.lt.s32.totalorder %s168, 13
          %s170 = scalar_select %p169, %s168, 13
          %s171 = smul.addr %s170, 8
          %s172 = scalar_lea.vmem %s2, %s171
          %s173 = smul.u32 14, %s23
        $region20: #{tpu_custom_call.1} parent=11 // pred_fallthru
          _
      $region12: #{tpu_custom_call.1} parent=5 // pred_fallthru
        _
      %p174 = scmp.lt.s32.totalorder %s12, 2
      // Predicated region
      $region21: #{tpu_custom_call.1} parent=5 // pred_check
        %p175 = pneg %p174
      $region22: #{tpu_custom_call.1} parent=5 // pred_check_branch
        %177 = sbr.rel (%p175) target = $region24
      $region23: #{tpu_custom_call.1} parent=5 // pred_region
        // Predicated region
        $region25: #{tpu_custom_call.1} parent=23 // pred_check
          %p178 = pneg %p53
        $region26: #{tpu_custom_call.1} parent=23 // pred_check_branch
          %180 = sbr.rel (%p178) target = $region28
        $region27: #{tpu_custom_call.1} parent=23 // pred_region
          %p181 = scmp.lt.s32.totalorder %s19, 1
          %s182 = scalar_select %p181, %s19, 1
          %p183 = scmp.lt.s32.totalorder %s21, 0
          %s184 = scalar_select %p183, %s21, 0
          %s185 = smul.addr %s182, 8
          %s186 = sadd.s32 %s184, %s185
          %s187 = smul.addr %s186, 8
          %s188 = scalar_lea.vmem %s0, %s187
        $region28: #{tpu_custom_call.1} parent=23 // pred_fallthru
          _
      $region24: #{tpu_custom_call.1} parent=5 // pred_fallthru
        _
      %p189 = scmp.le.s32.totalorder 1, %s12
      %p190 = scmp.lt.s32.totalorder %s12, 3
      %p191 = pnand %p189, %p190
      %p192 = pneg %p191
      // Predicated region
      $region29: #{tpu_custom_call.1} parent=5 // pred_check
        _
      $region30: #{tpu_custom_call.1} parent=5 // pred_check_branch
        %194 = sbr.rel (%p191) target = $region32
      $region31: #{tpu_custom_call.1} parent=5 // pred_region
        %s195 = ssub.s32 %s12, 1
        %p196 = scmp.lt.s32.totalorder %s22, 1
        %s197 = scalar_select %p196, %s22, 1
        %p198 = scmp.lt.s32.totalorder %s24, 0
        %s199 = scalar_select %p198, %s24, 0
        %s200 = smul.addr %s197, 8
        %s201 = sadd.s32 %s199, %s200
        %s202 = smul.addr %s201, 8
        %s203 = scalar_lea.vmem %s0, %s202
        %p204 = pneg %p59
        %p205 = pneg %p56
        %s206 = smul.u32 14, %s23
        %p207 = scmp.lt.s32.totalorder %s206, 13
        %s208 = scalar_select %p207, %s206, 13
        %s209 = smul.addr %s208, 8
        %s210 = scalar_lea.vmem %s1, %s209
        %p211 = pneg %p85
        %p212 = pneg %p82
        %s213 = smul.u32 14, %s23
        %p214 = scmp.lt.s32.totalorder %s213, 13
        %s215 = scalar_select %p214, %s213, 13
        %s216 = smul.addr %s215, 8
        %s217 = scalar_lea.vmem %s2, %s216
        %p218 = pneg %p111
        %p219 = pneg %p108
        %p220 = pneg %p141
        %p221 = pneg %p138
        %s222 = sand.u32 %s128, 1
        %s223 = scalar_lea.sflag [#allocation3], %s222
        %s224 = sand.u32 %s128, 1
        %s225 = smul.addr %s224, 112
        %s226 = scalar_lea.vmem [#allocation2], %s225
        %p227 = scmp.lt.s32.totalorder %s22, 1
        %s228 = scalar_select %p227, %s22, 1
        %p229 = scmp.lt.s32.totalorder %s24, 0
        %s230 = scalar_select %p229, %s24, 0
        %s231 = smul.addr %s228, 8
        %s232 = sadd.s32 %s230, %s231
        %s233 = smul.addr %s232, 8
        %s234 = scalar_lea.vmem %s0, %s233
        %s235 = smul.u32 14, %s23
        %p236 = scmp.lt.s32.totalorder %s235, 13
        %s237 = scalar_select %p236, %s235, 13
        %s238 = smul.addr %s237, 8
        %s239 = scalar_lea.vmem %s1, %s238
        %s240 = smul.u32 14, %s23
        %s241 = smul.u32 14, %s23
        %p242 = scmp.lt.s32.totalorder %s241, 13
        %s243 = scalar_select %p242, %s241, 13
        %s244 = smul.addr %s243, 8
        %s245 = scalar_lea.vmem %s2, %s244
        %s246 = smul.u32 14, %s23
        %s247 = smul.u32 14, %s23
        %v248 = vld [vmem:[%s239] sm:$0xff]
        %v249 = vld [vmem:[%s239 + $0x8] sm:$0xff]
        %v250 = vld [vmem:[%s239 + $0x10] sm:$0xff]
        %v251 = vld [vmem:[%s239 + $0x18] sm:$0xff]
        %v252 = vld [vmem:[%s239 + $0x20] sm:$0xff]
        %v253 = vld [vmem:[%s239 + $0x28] sm:$0xff]
        %v254 = vld [vmem:[%s239 + $0x30] sm:$0xff]
        %v255 = vld [vmem:[%s239 + $0x38] sm:$0xff]
        %v256 = vld [vmem:[%s239 + $0x40] sm:$0xff]
        %v257 = vld [vmem:[%s239 + $0x48] sm:$0xff]
        %v258 = vld [vmem:[%s239 + $0x50] sm:$0xff]
        %v259 = vld [vmem:[%s239 + $0x58] sm:$0xff]
        %v260 = vld [vmem:[%s239 + $0x60] sm:$0xff]
        %v261 = vld [vmem:[%s239 + $0x68] sm:$0xff]
        %v262 = vld [vmem:[%s234] sm:$0xff]
        %v263 = vld [vmem:[%s234 + $0x8] sm:$0xff]
        %v264 = vld [vmem:[%s234 + $0x10] sm:$0xff]
        %v265 = vld [vmem:[%s234 + $0x18] sm:$0xff]
        %v266 = vld [vmem:[%s234 + $0x20] sm:$0xff]
        %v267 = vld [vmem:[%s234 + $0x28] sm:$0xff]
        %v268 = vld [vmem:[%s234 + $0x30] sm:$0xff]
        %v269 = vld [vmem:[%s234 + $0x38] sm:$0xff]
        %v270 = vld [vmem:[%s245] sm:$0xff]
        %v271 = vld [vmem:[%s245 + $0x8] sm:$0xff]
        %v272 = vld [vmem:[%s245 + $0x10] sm:$0xff]
        %v273 = vld [vmem:[%s245 + $0x18] sm:$0xff]
        %v274 = vld [vmem:[%s245 + $0x20] sm:$0xff]
        %v275 = vld [vmem:[%s245 + $0x28] sm:$0xff]
        %v276 = vld [vmem:[%s245 + $0x30] sm:$0xff]
        %v277 = vld [vmem:[%s245 + $0x38] sm:$0xff]
        %v278 = vld [vmem:[%s245 + $0x40] sm:$0xff]
        %v279 = vld [vmem:[%s245 + $0x48] sm:$0xff]
        %v280 = vld [vmem:[%s245 + $0x50] sm:$0xff]
        %v281 = vld [vmem:[%s245 + $0x58] sm:$0xff]
        %v282 = vld [vmem:[%s245 + $0x60] sm:$0xff]
        %v283 = vld [vmem:[%s245 + $0x68] sm:$0xff]
        %285 = vset.pattern.permute.xlu0 0
        %286 = vperm.xlu0 %285, %v270
        %v287 = vpop.permute.xlu0 %286
        %290 = vset.pattern.permute.xlu0 0
        %291 = vperm.xlu0 %290, %v271
        %v292 = vpop.permute.xlu0 %291
        %295 = vset.pattern.permute.xlu0 0
        %296 = vperm.xlu0 %295, %v272
        %v297 = vpop.permute.xlu0 %296
        %300 = vset.pattern.permute.xlu0 0
        %301 = vperm.xlu0 %300, %v273
        %v302 = vpop.permute.xlu0 %301
        %305 = vset.pattern.permute.xlu0 0
        %306 = vperm.xlu0 %305, %v274
        %v307 = vpop.permute.xlu0 %306
        %310 = vset.pattern.permute.xlu0 0
        %311 = vperm.xlu0 %310, %v275
        %v312 = vpop.permute.xlu0 %311
        %315 = vset.pattern.permute.xlu0 0
        %316 = vperm.xlu0 %315, %v276
        %v317 = vpop.permute.xlu0 %316
        %320 = vset.pattern.permute.xlu0 0
        %321 = vperm.xlu0 %320, %v277
        %v322 = vpop.permute.xlu0 %321
        %325 = vset.pattern.permute.xlu0 0
        %326 = vperm.xlu0 %325, %v278
        %v327 = vpop.permute.xlu0 %326
        %330 = vset.pattern.permute.xlu0 0
        %331 = vperm.xlu0 %330, %v279
        %v332 = vpop.permute.xlu0 %331
        %335 = vset.pattern.permute.xlu0 0
        %336 = vperm.xlu0 %335, %v280
        %v337 = vpop.permute.xlu0 %336
        %340 = vset.pattern.permute.xlu0 0
        %341 = vperm.xlu0 %340, %v281
        %v342 = vpop.permute.xlu0 %341
        %345 = vset.pattern.permute.xlu0 0
        %346 = vperm.xlu0 %345, %v282
        %v347 = vpop.permute.xlu0 %346
        %350 = vset.pattern.permute.xlu0 0
        %351 = vperm.xlu0 %350, %v283
        %v352 = vpop.permute.xlu0 %351
        %vm354 = vcmask 523264
        %v356 = vsel %vm354, %v248, 0
        %v359 = vsel %vm354, %v249, 0
        %v362 = vsel %vm354, %v250, 0
        %v365 = vsel %vm354, %v251, 0
        %v368 = vsel %vm354, %v252, 0
        %v371 = vsel %vm354, %v253, 0
        %v374 = vsel %vm354, %v254, 0
        %v377 = vsel %vm354, %v255, 0
        %v380 = vsel %vm354, %v256, 0
        %v383 = vsel %vm354, %v257, 0
        %v386 = vsel %vm354, %v258, 0
        %v389 = vsel %vm354, %v259, 0
        %v392 = vsel %vm354, %v260, 0
        %v395 = vsel %vm354, %v261, 0
        %397 = vmatprep.subr.mxu0 0.0
        %398 = vmatpush1.msra.mxu0 0.0
        %399 = vmatprep.subr.mxu0 0.0
        %400 = vmatpush1.msra.mxu0 0.0
        %401 = vmatprep.subr.mxu0 0.0
        %402 = vmatpush1.msra.mxu0 0.0
        %403 = vmatprep.subr.mxu0 0.0
        %404 = vmatpush1.msra.mxu0 0.0
        %405 = vmatprep.subr.mxu0 0.0
        %406 = vmatpush1.msra.mxu0 0.0
        %407 = vmatprep.subr.mxu0 0.0
        %408 = vmatpush1.msra.mxu0 0.0
        %409 = vmatprep.subr.mxu0 0.0
        %410 = vmatpush1.msra.mxu0 0.0
        %411 = vmatprep.subr.mxu0 0.0
        %412 = vmatpush1.msra.mxu0 0.0
        %413 = vmatprep.subr.mxu0 0.0
        %414 = vmatpush1.msra.mxu0 %v269
        %415 = vmatprep.subr.mxu0 0.0
        %416 = vmatpush1.msra.mxu0 %v268
        %417 = vmatprep.subr.mxu0 0.0
        %418 = vmatpush1.msra.mxu0 %v267
        %419 = vmatprep.subr.mxu0 0.0
        %420 = vmatpush1.msra.mxu0 %v266
        %421 = vmatprep.subr.mxu0 0.0
        %422 = vmatpush1.msra.mxu0 %v265
        %423 = vmatprep.subr.mxu0 0.0
        %424 = vmatpush1.msra.mxu0 %v264
        %425 = vmatprep.subr.mxu0 0.0
        %426 = vmatpush1.msra.mxu0 %v263
        %427 = vmatprep.subr.mxu0 0.0
        %428 = vmatpush1.msra.mxu0 %v262
        %429 = vmatprep.subr.mxu0 0.0
        %430 = vmatpush2.msra.mxu0 0.0
        %431 = vmatprep.subr.mxu0 0.0
        %432 = vmatpush2.msra.mxu0 0.0
        %433 = vmatprep.subr.mxu0 0.0
        %434 = vmatpush2.msra.mxu0 0.0
        %435 = vmatprep.subr.mxu0 0.0
        %436 = vmatpush2.msra.mxu0 0.0
        %437 = vmatprep.subr.mxu0 0.0
        %438 = vmatpush2.msra.mxu0 0.0
        %439 = vmatprep.subr.mxu0 0.0
        %440 = vmatpush2.msra.mxu0 0.0
        %441 = vmatprep.subr.mxu0 0.0
        %442 = vmatpush2.msra.mxu0 0.0
        %443 = vmatprep.subr.mxu0 0.0
        %444 = vmatpush2.msra.mxu0 0.0
        %445 = vmatprep.subr.mxu0 0.0
        %446 = vmatpush2.msra.mxu0 0.0
        %447 = vmatprep.subr.mxu0 0.0
        %448 = vmatpush2.msra.mxu0 0.0
        %449 = vmatprep.subr.mxu0 0.0
        %450 = vmatpush2.msra.mxu0 0.0
        %451 = vmatprep.subr.mxu0 0.0
        %452 = vmatpush2.msra.mxu0 0.0
        %453 = vmatprep.subr.mxu0 0.0
        %454 = vmatpush2.msra.mxu0 0.0
        %455 = vmatprep.subr.mxu0 0.0
        %456 = vmatpush2.msra.mxu0 0.0
        %457 = vmatprep.subr.mxu0 0.0
        %458 = vmatpush2.msra.mxu0 0.0
        %459 = vmatprep.subr.mxu0 0.0
        %460 = vmatpush2.msra.mxu0 0.0
        %461 = vmatprep.mubr.f32.mxu0 0.0
        %462 = vmatmul.mubr.f32.gmra.mxu0 %v356
        %v463 = vpop.f32.mrf.mxu0
        %v464 = vadd.f32 %v287, %v463
        %v465 = vpop.f32.mrf.mxu0
        %466 = vmatprep.mubr.f32.mxu0 0.0
        %467 = vmatmul.mubr.f32.gmra.mxu0 %v359
        %v468 = vpop.f32.mrf.mxu0
        %v469 = vadd.f32 %v292, %v468
        %v470 = vpop.f32.mrf.mxu0
        %471 = vmatprep.mubr.f32.mxu0 0.0
        %472 = vmatmul.mubr.f32.gmra.mxu0 %v362
        %v473 = vpop.f32.mrf.mxu0
        %v474 = vadd.f32 %v297, %v473
        %v475 = vpop.f32.mrf.mxu0
        %476 = vmatprep.mubr.f32.mxu0 0.0
        %477 = vmatmul.mubr.f32.gmra.mxu0 %v365
        %v478 = vpop.f32.mrf.mxu0
        %v479 = vadd.f32 %v302, %v478
        %v480 = vpop.f32.mrf.mxu0
        %481 = vmatprep.mubr.f32.mxu0 0.0
        %482 = vmatmul.mubr.f32.gmra.mxu0 %v368
        %v483 = vpop.f32.mrf.mxu0
        %v484 = vadd.f32 %v307, %v483
        %v485 = vpop.f32.mrf.mxu0
        %486 = vmatprep.mubr.f32.mxu0 0.0
        %487 = vmatmul.mubr.f32.gmra.mxu0 %v371
        %v488 = vpop.f32.mrf.mxu0
        %v489 = vadd.f32 %v312, %v488
        %v490 = vpop.f32.mrf.mxu0
        %491 = vmatprep.mubr.f32.mxu0 0.0
        %492 = vmatmul.mubr.f32.gmra.mxu0 %v374
        %v493 = vpop.f32.mrf.mxu0
        %v494 = vadd.f32 %v317, %v493
        %v495 = vpop.f32.mrf.mxu0
        %496 = vmatprep.mubr.f32.mxu0 0.0
        %497 = vmatmul.mubr.f32.gmra.mxu0 %v377
        %v498 = vpop.f32.mrf.mxu0
        %v499 = vadd.f32 %v322, %v498
        %v500 = vpop.f32.mrf.mxu0
        %501 = vmatprep.mubr.f32.mxu0 0.0
        %502 = vmatmul.mubr.f32.gmra.mxu0 %v380
        %v503 = vpop.f32.mrf.mxu0
        %v504 = vadd.f32 %v327, %v503
        %v505 = vpop.f32.mrf.mxu0
        %506 = vmatprep.mubr.f32.mxu0 0.0
        %507 = vmatmul.mubr.f32.gmra.mxu0 %v383
        %v508 = vpop.f32.mrf.mxu0
        %v509 = vadd.f32 %v332, %v508
        %v510 = vpop.f32.mrf.mxu0
        %511 = vmatprep.mubr.f32.mxu0 0.0
        %512 = vmatmul.mubr.f32.gmra.mxu0 %v386
        %v513 = vpop.f32.mrf.mxu0
        %v514 = vadd.f32 %v337, %v513
        %v515 = vpop.f32.mrf.mxu0
        %516 = vmatprep.mubr.f32.mxu0 0.0
        %517 = vmatmul.mubr.f32.gmra.mxu0 %v389
        %v518 = vpop.f32.mrf.mxu0
        %v519 = vadd.f32 %v342, %v518
        %v520 = vpop.f32.mrf.mxu0
        %521 = vmatprep.mubr.f32.mxu0 0.0
        %522 = vmatmul.mubr.f32.gmra.mxu0 %v392
        %v523 = vpop.f32.mrf.mxu0
        %v524 = vadd.f32 %v347, %v523
        %v525 = vpop.f32.mrf.mxu0
        %526 = vmatprep.mubr.f32.mxu0 0.0
        %527 = vmatmul.mubr.f32.gmra.mxu0 %v395
        %v528 = vpop.f32.mrf.mxu0
        %v529 = vadd.f32 %v352, %v528
        %v530 = vpop.f32.mrf.mxu0
        %531 = vdwg.mxu0
        %532 = vst [vmem:[%s226] sm:$0xff] %v464
        %533 = vst [vmem:[%s226 + $0x8] sm:$0xff] %v469
        %534 = vst [vmem:[%s226 + $0x10] sm:$0xff] %v474
        %535 = vst [vmem:[%s226 + $0x18] sm:$0xff] %v479
        %536 = vst [vmem:[%s226 + $0x20] sm:$0xff] %v484
        %537 = vst [vmem:[%s226 + $0x28] sm:$0xff] %v489
        %538 = vst [vmem:[%s226 + $0x30] sm:$0xff] %v494
        %539 = vst [vmem:[%s226 + $0x38] sm:$0xff] %v499
        %540 = vst [vmem:[%s226 + $0x40] sm:$0xff] %v504
        %541 = vst [vmem:[%s226 + $0x48] sm:$0xff] %v509
        %542 = vst [vmem:[%s226 + $0x50] sm:$0xff] %v514
        %543 = vst [vmem:[%s226 + $0x58] sm:$0xff] %v519
        %544 = vst [vmem:[%s226 + $0x60] sm:$0xff] %v524
        %545 = vst [vmem:[%s226 + $0x68] sm:$0xff] %v529
        %s546 = sand.u32 %s128, 1
        %s547 = scalar_lea.sflag [#allocation3], %s546
        %s548 = sand.u32 %s128, 1
        %s549 = smul.addr %s548, 112
        %s550 = scalar_lea.vmem [#allocation2], %s549
        // Predicated region
        $region33: #{tpu_custom_call.1} parent=31 // pred_check
          %p551 = pneg %p138
        $region34: #{tpu_custom_call.1} parent=31 // pred_check_branch
          %553 = sbr.rel (%p551) target = $region36
        $region35: #{tpu_custom_call.1} parent=31 // pred_region
          %s554 = smul.u32 14, %s23
          %s556 = ssub.s32 1792, 1792
          %557 = vsyncadd %s547, %s556
          %s558 = sadd.s32 %s24, %s554
          %s559 = smul.addr %s22, 14
          %s560 = sadd.s32 %s558, %s559
          %s561 = smul.addr %s560, 128
          %s562 = scalar_lea.hbm %s3, %s561
          %s563 = sshll.u32 %s550, 4
          %s564 = int_to_ptr.vmem [resolvable:$true] %s563
          %569 = dma.vmem_to_hbm [thread:$0]  %s564, 1792, %s562, %s547, 128, 128, 8
        $region36: #{tpu_custom_call.1} parent=31 // pred_fallthru
          _
      $region32: #{tpu_custom_call.1} parent=5 // pred_fallthru
        _
      %p570 = scmp.le.s32.totalorder 2, %s12
      // Predicated region
      $region37: #{tpu_custom_call.1} parent=5 // pred_check
        %p571 = pneg %p570
      $region38: #{tpu_custom_call.1} parent=5 // pred_check_branch
        %573 = sbr.rel (%p571) target = $region40
      $region39: #{tpu_custom_call.1} parent=5 // pred_region
        %s574 = ssub.s32 %s12, 2
        // Predicated region
        $region41: #{tpu_custom_call.1} parent=39 // pred_check
          %p575 = pneg %p144
        $region42: #{tpu_custom_call.1} parent=39 // pred_check_branch
          %577 = sbr.rel (%p575) target = $region44
        $region43: #{tpu_custom_call.1} parent=39 // pred_region
          %s578 = sand.u32 %s129, 1
          %s579 = scalar_lea.sflag [#allocation3], %s578
          %s580 = sand.u32 %s129, 1
          %s581 = smul.addr %s580, 112
          %s582 = scalar_lea.vmem [#allocation2], %s581
          %583 = dma.done %s579, 1792
        $region44: #{tpu_custom_call.1} parent=39 // pred_fallthru
          _
      $region40: #{tpu_custom_call.1} parent=5 // pred_fallthru
        _
    $region6: #{tpu_custom_call.1} parent=1 // loop_footer
      %s16 = sadd.s32 1, %s12
    $region7: #{tpu_custom_call.1} parent=1 // loop_footer_branch
      %11 = sbr.rel target = $region3
    $region8: #{tpu_custom_call.1} parent=1 // loop_exit
      _
    %584 = vsyncpa [#allocation3], 1
    %s585 = scalar_lea.sflag [#allocation3], 1
    %586 = vsyncpa %s585, 1

</llo_original>
